<compile_context>
chip_gen: v7x
topology: tpu7x:2x2x1
jax: 0.10.0
libtpu: 0.0.40
codegen_flags: <defaults>
</compile_context>

<pallas_src>
import jax
import jax.numpy as jnp
from jax import lax
from jax.experimental import pallas as pl
from jax.experimental.pallas import tpu as pltpu


def _round_up(x, m):
    return (x + m - 1) // m * m


def _fused_rgcn_kernel(adj_ref, x_ref, w1_ref, w2_ref, b_ref, h_ref, score_ref):
    n_dis_p, n_drug_p = adj_ref.shape
    hid = w1_ref.shape[1] // 2
    out = w2_ref.shape[1] // 2

    # ---- shared symmetric normalization (DGL GraphConv norm='both', clamp(min=1)) ----
    adj = adj_ref[...]                                                # (n_dis_p, n_drug_p)
    out_deg = jnp.maximum(jnp.sum(adj, axis=0, keepdims=True), 1.0)   # drug out-degree
    in_deg = jnp.maximum(jnp.sum(adj, axis=1, keepdims=True), 1.0)    # disease in-degree
    a_hat = adj * lax.rsqrt(in_deg) * lax.rsqrt(out_deg)
    # 'treated-by' normalized adjacency is exactly a_hat.T (degree roles swap).
    # Materialize the transpose ONCE and reuse it for both layers.
    a_hat_t = a_hat.T                                                 # (n_drug_p, n_dis_p)

    # ---- unpack the packed operands with static slices (zero-cost views) ----
    h_drug = x_ref[0:n_drug_p, :]                                     # (n_drug_p, in)
    h_dis = x_ref[n_drug_p:n_drug_p + n_dis_p, :]                     # (n_dis_p, in)
    w1 = w1_ref[...]
    w2 = w2_ref[...]
    b = b_ref[...]
    w1t, w1b = w1[:, 0:hid], w1[:, hid:]
    w2t, w2b = w2[:, 0:out], w2[:, out:]
    b1t, b1b = b[0:1, 0:hid], b[1:2, 0:hid]
    b2t, b2b = b[2:3, 0:out], b[3:4, 0:out]

    mm = lambda a, b_: jnp.dot(a, b_, preferred_element_type=jnp.float32)

    # ---- RGCN layer 1 + ReLU (each dst ntype receives exactly one relation) ----
    h_dis1 = jnp.maximum(mm(mm(a_hat, h_drug), w1t) + b1t, 0.0)       # (n_dis_p, hid)
    h_drug1 = jnp.maximum(mm(mm(a_hat_t, h_dis), w1b) + b1b, 0.0)     # (n_drug_p, hid)

    # ---- RGCN layer 2 (no activation) ----
    h_dis2 = mm(mm(a_hat, h_drug1), w2t) + b2t                        # (n_dis_p, out)
    h_drug2 = mm(mm(a_hat_t, h_dis1), w2b) + b2b                      # (n_drug_p, out)

    # RGCN forward output, packed: drug rows first, then disease rows.
    h_ref[0:n_drug_p, :] = h_drug2
    h_ref[n_drug_p:n_drug_p + n_dis_p, :] = h_dis2

    # Fused HeteroDotProductPredictor score matrix S[u, v] = <h_drug2[u], h_dis2[v]>.
    # n_dis_p is a multiple of 128 -> lane-dense, unmasked full-width stores.
    score_ref[...] = lax.dot_general(h_drug2, h_dis2, (((1,), (1,)), ((), ())),
                                     preferred_element_type=jnp.float32)


def rgcn_forward_fused(params, adj_treats):
    """Whole RGCN forward (+ predictor score matrix) as one fused Pallas kernel.

    Returns (h_dict, score_matrix) with h_dict matching RGCN.forward's output and
    score_matrix[u, v] = <h['drug'][u], h['disease'][v]>.
    """
    n_dis, n_drug = adj_treats.shape
    in_f = params["embed_drug"].shape[1]
    hid = params["w1_treats"].shape[1]
    out = params["w2_treats"].shape[1]

    # Pad: drug dim to sublane multiple (8), disease dim to lane multiple (128) so the
    # score output is lane-dense. Padded rows have zero adjacency rows/cols, so after the
    # clamp(min=1) degree normalization they contribute exactly zero to valid outputs.
    n_drug_p = _round_up(n_drug, 8)
    n_dis_p = _round_up(n_dis, 128)

    adj_p = jnp.zeros((n_dis_p, n_drug_p), jnp.float32).at[:n_dis, :n_drug].set(adj_treats)

    # Packed node features: drug rows then disease rows.
    x_p = jnp.zeros((n_drug_p + n_dis_p, in_f), jnp.float32)
    x_p = x_p.at[:n_drug, :].set(params["embed_drug"])
    x_p = x_p.at[n_drug_p:n_drug_p + n_dis, :].set(params["embed_disease"])

    # Packed relation weights: [W_treats | W_treated_by] along the output dim.
    w1_p = jnp.concatenate([params["w1_treats"], params["w1_tb"]], axis=1)   # (in, 2*hid)
    w2_p = jnp.concatenate([params["w2_treats"], params["w2_tb"]], axis=1)   # (hid, 2*out)

    # Packed biases: rows = [b1_treats, b1_tb, b2_treats, b2_tb].
    bw = max(hid, out)
    b_p = jnp.zeros((4, bw), jnp.float32)
    b_p = b_p.at[0, :hid].set(params["b1_treats"].reshape(-1))
    b_p = b_p.at[1, :hid].set(params["b1_tb"].reshape(-1))
    b_p = b_p.at[2, :out].set(params["b2_treats"].reshape(-1))
    b_p = b_p.at[3, :out].set(params["b2_tb"].reshape(-1))

    vmem = pl.BlockSpec(memory_space=pltpu.MemorySpace.VMEM)
    # NOTE: single-block, no-grid design is right at this size. If the graph scales
    # (e.g. adjacency approaching v7x's 64 MiB VMEM), switch to a gridded pallas_call
    # with BlockSpec tiles over (dst, src), reduction axis last,
    # dimension_semantics=("parallel", ..., "arbitrary"), and bf16 MXU inputs.
    h_packed, scores = pl.pallas_call(
        _fused_rgcn_kernel,
        out_shape=(
            jax.ShapeDtypeStruct((n_drug_p + n_dis_p, out), jnp.float32),
            jax.ShapeDtypeStruct((n_drug_p, n_dis_p), jnp.float32),
        ),
        in_specs=[vmem] * 5,
        out_specs=(vmem, vmem),
    )(adj_p, x_p, w1_p, w2_p, b_p)

    h = {
        "drug": h_packed[:n_drug, :],
        "disease": h_packed[n_drug_p:n_drug_p + n_dis, :],
    }
    return h, scores[:n_drug, :n_dis]


def model_forward(params, adj_treats, pos_edges, neg_edges):
    h, scores = rgcn_forward_fused(params, adj_treats)
    pos_src, pos_dst = pos_edges
    neg_src, neg_dst = neg_edges
    # u_dot_v on etype ('drug','treats','disease'): gather of E scalars, done in XLA.
    pos_score = scores[pos_src, pos_dst][:, None]    # (E_pos, 1)
    neg_score = scores[neg_src, neg_dst][:, None]    # (E_neg, 1)
    return h, pos_score, neg_score


def xavier_uniform(key, shape):
    fan_in, fan_out = shape
    limit = (6.0 / (fan_in + fan_out)) ** 0.5
    return jax.random.uniform(key, shape, jnp.float32, -limit, limit)


if __name__ == "__main__":
    # small synthetic graph consistent with RGCN(in_feats, hid_feats, out_feats, rel_names)
    n_drug, n_disease = 8, 12
    in_feats, hid_feats, out_feats = 16, 32, 32
    n_edges, k_neg = 20, 1

    key = jax.random.PRNGKey(0)
    keys = jax.random.split(key, 10)

    # positive 'treats' edges: drug -> disease
    src = jax.random.randint(keys[0], (n_edges,), 0, n_drug)
    dst = jax.random.randint(keys[1], (n_edges,), 0, n_disease)

    # dense relation adjacency (n_dst, n_src); multi-edges accumulate like DGL copy_u/sum.
    # 'treated-by' is its transpose and is derived inside the kernel (no second adjacency).
    adj_treats = jnp.zeros((n_disease, n_drug), jnp.float32).at[dst, src].add(1.0)

    # construct_negative_graph(g, k, ('drug','treats','disease'))
    neg_src = jnp.repeat(src, k_neg)
    neg_dst = jax.random.randint(keys[2], (n_edges * k_neg,), 0, n_disease)

    # parameters (xavier-uniform embeddings & GraphConv weights, zero biases)
    params = {
        "embed_drug": xavier_uniform(keys[3], (n_drug, in_feats)),
        "embed_disease": xavier_uniform(keys[4], (n_disease, in_feats)),
        "w1_treats": xavier_uniform(keys[5], (in_feats, hid_feats)),
        "b1_treats": jnp.zeros((1, hid_feats), jnp.float32),
        "w1_tb": xavier_uniform(keys[6], (in_feats, hid_feats)),
        "b1_tb": jnp.zeros((1, hid_feats), jnp.float32),
        "w2_treats": xavier_uniform(keys[7], (hid_feats, out_feats)),
        "b2_treats": jnp.zeros((1, out_feats), jnp.float32),
        "w2_tb": xavier_uniform(keys[8], (hid_feats, out_feats)),
        "b2_tb": jnp.zeros((1, out_feats), jnp.float32),
    }

    fwd = jax.jit(model_forward)
    h, pos_score, neg_score = fwd(params, adj_treats, (src, dst), (neg_src, neg_dst))
    jax.block_until_ready((h, pos_score, neg_score))
    assert h["drug"].shape == (n_drug, out_feats)
    assert h["disease"].shape == (n_disease, out_feats)
    assert pos_score.shape == (n_edges, 1) and neg_score.shape == (n_edges * k_neg, 1)
    print("KERNEL_OK")
</pallas_src>

<mosaic_0001>
module attributes {stable_mosaic.version = 11 : i64} {
  func.func @_fused_rgcn_kernel(%arg0: memref<128x8xf32, #tpu.memory_space<vmem>>, %arg1: memref<136x16xf32, #tpu.memory_space<vmem>>, %arg2: memref<16x64xf32, #tpu.memory_space<vmem>>, %arg3: memref<32x64xf32, #tpu.memory_space<vmem>>, %arg4: memref<4x32xf32, #tpu.memory_space<vmem>>, %arg5: memref<136x32xf32, #tpu.memory_space<vmem>>, %arg6: memref<8x128xf32, #tpu.memory_space<vmem>>) attributes {dimension_semantics = [], scalar_prefetch = 0 : i64, scratch_operands = 0 : i64, tpu.core_type = #tpu.core_type<tc>} {
    %c0 = arith.constant 0 : index
    %c0_0 = arith.constant 0 : index
    %0 = vector.load %arg0[%c0, %c0_0] : memref<128x8xf32, #tpu.memory_space<vmem>>, vector<128x8xf32>
    %cst = arith.constant dense<0.000000e+00> : vector<8xf32>
    %1 = vector.multi_reduction <add>, %0, %cst [0] : vector<128x8xf32> to vector<8xf32>
    %2 = vector.shape_cast %1 : vector<8xf32> to vector<1x8xf32>
    %cst_1 = arith.constant 1.000000e+00 : f32
    %3 = vector.broadcast %cst_1 : f32 to vector<1x8xf32>
    %4 = arith.maximumf %2, %3 : vector<1x8xf32>
    %cst_2 = arith.constant dense<0.000000e+00> : vector<128xf32>
    %5 = vector.multi_reduction <add>, %0, %cst_2 [1] : vector<128x8xf32> to vector<128xf32>
    %6 = vector.shape_cast %5 : vector<128xf32> to vector<128x1xf32>
    %cst_3 = arith.constant 1.000000e+00 : f32
    %7 = vector.broadcast %cst_3 : f32 to vector<128x1xf32>
    %8 = arith.maximumf %6, %7 : vector<128x1xf32>
    %9 = math.rsqrt %8 : vector<128x1xf32>
    %10 = vector.broadcast %9 : vector<128x1xf32> to vector<128x8xf32>
    %11 = arith.mulf %0, %10 : vector<128x8xf32>
    %12 = math.rsqrt %4 : vector<1x8xf32>
    %13 = vector.broadcast %12 : vector<1x8xf32> to vector<128x8xf32>
    %14 = arith.mulf %11, %13 : vector<128x8xf32>
    %15 = tpu.transpose %14, [1, 0] : vector<128x8xf32> -> vector<8x128xf32>
    %c0_4 = arith.constant 0 : index
    %c0_5 = arith.constant 0 : index
    %16 = vector.load %arg1[%c0_4, %c0_5] : memref<136x16xf32, #tpu.memory_space<vmem>>, vector<8x16xf32>
    %c8 = arith.constant 8 : index
    %c0_6 = arith.constant 0 : index
    %17 = vector.load %arg1[%c8, %c0_6] : memref<136x16xf32, #tpu.memory_space<vmem>>, vector<128x16xf32>
    %c0_7 = arith.constant 0 : index
    %c0_8 = arith.constant 0 : index
    %18 = vector.load %arg2[%c0_7, %c0_8] : memref<16x64xf32, #tpu.memory_space<vmem>>, vector<16x64xf32>
    %c0_9 = arith.constant 0 : index
    %c0_10 = arith.constant 0 : index
    %19 = vector.load %arg3[%c0_9, %c0_10] : memref<32x64xf32, #tpu.memory_space<vmem>>, vector<32x64xf32>
    %c0_11 = arith.constant 0 : index
    %c0_12 = arith.constant 0 : index
    %20 = vector.load %arg4[%c0_11, %c0_12] : memref<4x32xf32, #tpu.memory_space<vmem>>, vector<4x32xf32>
    %21 = vector.extract_strided_slice %18 {offsets = [0, 0], sizes = [16, 32], strides = [1, 1]} : vector<16x64xf32> to vector<16x32xf32>
    %22 = vector.extract_strided_slice %18 {offsets = [0, 32], sizes = [16, 32], strides = [1, 1]} : vector<16x64xf32> to vector<16x32xf32>
    %23 = vector.extract_strided_slice %19 {offsets = [0, 0], sizes = [32, 32], strides = [1, 1]} : vector<32x64xf32> to vector<32x32xf32>
    %24 = vector.extract_strided_slice %19 {offsets = [0, 32], sizes = [32, 32], strides = [1, 1]} : vector<32x64xf32> to vector<32x32xf32>
    %25 = vector.extract_strided_slice %20 {offsets = [0, 0], sizes = [1, 32], strides = [1, 1]} : vector<4x32xf32> to vector<1x32xf32>
    %26 = vector.extract_strided_slice %20 {offsets = [1, 0], sizes = [1, 32], strides = [1, 1]} : vector<4x32xf32> to vector<1x32xf32>
    %27 = vector.extract_strided_slice %20 {offsets = [2, 0], sizes = [1, 32], strides = [1, 1]} : vector<4x32xf32> to vector<1x32xf32>
    %28 = vector.extract_strided_slice %20 {offsets = [3, 0], sizes = [1, 32], strides = [1, 1]} : vector<4x32xf32> to vector<1x32xf32>
    %cst_13 = arith.constant dense<0.000000e+00> : vector<128x16xf32>
    %29 = tpu.matmul %14, %16, %cst_13 {dimension_numbers = #tpu.dot_dimension_numbers<[1], [0], [0], [1], [0, 0, 1, 1], [], []>} : vector<128x8xf32>, vector<8x16xf32>, vector<128x16xf32> -> vector<128x16xf32>
    %cst_14 = arith.constant dense<0.000000e+00> : vector<128x32xf32>
    %30 = tpu.matmul %29, %21, %cst_14 {dimension_numbers = #tpu.dot_dimension_numbers<[1], [0], [0], [1], [0, 0, 1, 1], [], []>} : vector<128x16xf32>, vector<16x32xf32>, vector<128x32xf32> -> vector<128x32xf32>
    %31 = vector.broadcast %25 : vector<1x32xf32> to vector<128x32xf32>
    %32 = arith.addf %30, %31 : vector<128x32xf32>
    %cst_15 = arith.constant 0.000000e+00 : f32
    %33 = vector.broadcast %cst_15 : f32 to vector<128x32xf32>
    %34 = arith.maximumf %32, %33 : vector<128x32xf32>
    %cst_16 = arith.constant dense<0.000000e+00> : vector<8x16xf32>
    %35 = tpu.matmul %15, %17, %cst_16 {dimension_numbers = #tpu.dot_dimension_numbers<[1], [0], [0], [1], [0, 0, 1, 1], [], []>} : vector<8x128xf32>, vector<128x16xf32>, vector<8x16xf32> -> vector<8x16xf32>
    %cst_17 = arith.constant dense<0.000000e+00> : vector<8x32xf32>
    %36 = tpu.matmul %35, %22, %cst_17 {dimension_numbers = #tpu.dot_dimension_numbers<[1], [0], [0], [1], [0, 0, 1, 1], [], []>} : vector<8x16xf32>, vector<16x32xf32>, vector<8x32xf32> -> vector<8x32xf32>
    %37 = vector.broadcast %26 : vector<1x32xf32> to vector<8x32xf32>
    %38 = arith.addf %36, %37 : vector<8x32xf32>
    %cst_18 = arith.constant 0.000000e+00 : f32
    %39 = vector.broadcast %cst_18 : f32 to vector<8x32xf32>
    %40 = arith.maximumf %38, %39 : vector<8x32xf32>
    %cst_19 = arith.constant dense<0.000000e+00> : vector<128x32xf32>
    %41 = tpu.matmul %14, %40, %cst_19 {dimension_numbers = #tpu.dot_dimension_numbers<[1], [0], [0], [1], [0, 0, 1, 1], [], []>} : vector<128x8xf32>, vector<8x32xf32>, vector<128x32xf32> -> vector<128x32xf32>
    %cst_20 = arith.constant dense<0.000000e+00> : vector<128x32xf32>
    %42 = tpu.matmul %41, %23, %cst_20 {dimension_numbers = #tpu.dot_dimension_numbers<[1], [0], [0], [1], [0, 0, 1, 1], [], []>} : vector<128x32xf32>, vector<32x32xf32>, vector<128x32xf32> -> vector<128x32xf32>
    %43 = vector.broadcast %27 : vector<1x32xf32> to vector<128x32xf32>
    %44 = arith.addf %42, %43 : vector<128x32xf32>
    %cst_21 = arith.constant dense<0.000000e+00> : vector<8x32xf32>
    %45 = tpu.matmul %15, %34, %cst_21 {dimension_numbers = #tpu.dot_dimension_numbers<[1], [0], [0], [1], [0, 0, 1, 1], [], []>} : vector<8x128xf32>, vector<128x32xf32>, vector<8x32xf32> -> vector<8x32xf32>
    %cst_22 = arith.constant dense<0.000000e+00> : vector<8x32xf32>
    %46 = tpu.matmul %45, %24, %cst_22 {dimension_numbers = #tpu.dot_dimension_numbers<[1], [0], [0], [1], [0, 0, 1, 1], [], []>} : vector<8x32xf32>, vector<32x32xf32>, vector<8x32xf32> -> vector<8x32xf32>
    %47 = vector.broadcast %28 : vector<1x32xf32> to vector<8x32xf32>
    %48 = arith.addf %46, %47 : vector<8x32xf32>
    %c0_23 = arith.constant 0 : index
    %c0_24 = arith.constant 0 : index
    %49 = vector.load %arg5[%c0_23, %c0_24] : memref<136x32xf32, #tpu.memory_space<vmem>>, vector<8x32xf32>
    tpu.vector_store %arg5[%c0_23, %c0_24], %48 {strides = array<i32>} : memref<136x32xf32, #tpu.memory_space<vmem>>, vector<8x32xf32>,
    %c8_25 = arith.constant 8 : index
    %c0_26 = arith.constant 0 : index
    %50 = vector.load %arg5[%c8_25, %c0_26] : memref<136x32xf32, #tpu.memory_space<vmem>>, vector<128x32xf32>
    tpu.vector_store %arg5[%c8_25, %c0_26], %44 {strides = array<i32>} : memref<136x32xf32, #tpu.memory_space<vmem>>, vector<128x32xf32>,
    %cst_27 = arith.constant dense<0.000000e+00> : vector<8x128xf32>
    %51 = tpu.matmul %48, %44, %cst_27 {dimension_numbers = #tpu.dot_dimension_numbers<[1], [1], [0], [0], [0, 0, 1, 0], [], []>} : vector<8x32xf32>, vector<128x32xf32>, vector<8x128xf32> -> vector<8x128xf32>
    %c0_28 = arith.constant 0 : index
    %c0_29 = arith.constant 0 : index
    %52 = vector.load %arg6[%c0_28, %c0_29] : memref<8x128xf32, #tpu.memory_space<vmem>>, vector<8x128xf32>
    tpu.vector_store %arg6[%c0_28, %c0_29], %51 {strides = array<i32>} : memref<8x128xf32, #tpu.memory_space<vmem>>, vector<8x128xf32>,
    return
  }
}

</mosaic_0001>

<llo_original>
// kernel: model_forward.1
$region0: #{model_forward.1}
  #allocation0 [shape = 'u32[]', space=smem, size = 0x4, offset = 0x4, fixed_abs, tag = 'smem constant byte address 0x4 - core index']
  #allocation1 [shape = 'u32[144,128]{1,0:T(1,128)}', space=vmem, size = 0x12000, scoped, tag = 'internal scratch']
  %s0 = inlined_call_operand.vmem [shape: f32[128,8], index: 0, kind: input, shape index: {}]
  %s1 = inlined_call_operand.vmem [shape: f32[136,16], index: 1, kind: input, shape index: {}]
  %s2 = inlined_call_operand.vmem [shape: f32[16,64], index: 2, kind: input, shape index: {}]
  %s3 = inlined_call_operand.vmem [shape: f32[32,64], index: 3, kind: input, shape index: {}]
  %s4 = inlined_call_operand.vmem [shape: f32[4,32], index: 4, kind: input, shape index: {}]
  %s5 = inlined_call_operand.vmem [shape: f32[136,32], index: 5, kind: output, shape index: {0}]
  %s6 = inlined_call_operand.vmem [shape: f32[8,128], index: 6, kind: output, shape index: {1}]
  %7 = xla_tuple %s5, %s6
  %s8 = sld [smem:[#allocation0]]
  $region38: #{model_forward.1} parent=0
    _
  %s10 = ssub.s32 1, %s8
  %s11 = scalar_select 0, %s10, %s8
  // Predicated region
  $region2: #{model_forward.1} parent=0 // pred_check
    _
  $region3: #{model_forward.1} parent=0 // pred_check_branch
    %13 = sbr.rel (0) target = $region5
  $region4: #{model_forward.1} parent=0 // pred_region
    _
  $region5: #{model_forward.1} parent=0 // pred_fallthru
    _
  // Predicated region
  $region6: #{model_forward.1} parent=0 // pred_check
    _
  $region7: #{model_forward.1} parent=0 // pred_check_branch
    %15 = sbr.rel (0) target = $region9
  $region8: #{model_forward.1} parent=0 // pred_region
    _
  $region9: #{model_forward.1} parent=0 // pred_fallthru
    _
  // Predicated region
  $region10: #{model_forward.1} parent=0 // pred_check
    _
  $region11: #{model_forward.1} parent=0 // pred_check_branch
    %17 = sbr.rel (0) target = $region13
  $region12: #{model_forward.1} parent=0 // pred_region
    _
  $region13: #{model_forward.1} parent=0 // pred_fallthru
    _
  // Predicated region
  $region14: #{model_forward.1} parent=0 // pred_check
    _
  $region15: #{model_forward.1} parent=0 // pred_check_branch
    %19 = sbr.rel (0) target = $region17
  $region16: #{model_forward.1} parent=0 // pred_region
    _
  $region17: #{model_forward.1} parent=0 // pred_fallthru
    _
  // Predicated region
  $region18: #{model_forward.1} parent=0 // pred_check
    _
  $region19: #{model_forward.1} parent=0 // pred_check_branch
    %21 = sbr.rel (0) target = $region21
  $region20: #{model_forward.1} parent=0 // pred_region
    _
  $region21: #{model_forward.1} parent=0 // pred_fallthru
    _
  %v22 = vld [vmem:[%s0] sm:$0xff]
  %v23 = vld [vmem:[%s0 + $0x8] sm:$0xff]
  %v24 = vld [vmem:[%s0 + $0x10] sm:$0xff]
  %v25 = vld [vmem:[%s0 + $0x18] sm:$0xff]
  %v26 = vld [vmem:[%s0 + $0x20] sm:$0xff]
  %v27 = vld [vmem:[%s0 + $0x28] sm:$0xff]
  %v28 = vld [vmem:[%s0 + $0x30] sm:$0xff]
  %v29 = vld [vmem:[%s0 + $0x38] sm:$0xff]
  %v30 = vld [vmem:[%s0 + $0x40] sm:$0xff]
  %v31 = vld [vmem:[%s0 + $0x48] sm:$0xff]
  %v32 = vld [vmem:[%s0 + $0x50] sm:$0xff]
  %v33 = vld [vmem:[%s0 + $0x58] sm:$0xff]
  %v34 = vld [vmem:[%s0 + $0x60] sm:$0xff]
  %v35 = vld [vmem:[%s0 + $0x68] sm:$0xff]
  %v36 = vld [vmem:[%s0 + $0x70] sm:$0xff]
  %v37 = vld [vmem:[%s0 + $0x78] sm:$0xff]
  %vm38 = vcmask 64512
  %v39 = vsel %vm38, %v22, 0.0
  %v40 = vsel %vm38, %v23, 0.0
  %v41 = vadd.f32 %v39, %v40
  %v42 = vsel %vm38, %v24, 0.0
  %v43 = vadd.f32 %v41, %v42
  %v44 = vsel %vm38, %v25, 0.0
  %v45 = vadd.f32 %v43, %v44
  %v46 = vsel %vm38, %v26, 0.0
  %v47 = vadd.f32 %v45, %v46
  %v48 = vsel %vm38, %v27, 0.0
  %v49 = vadd.f32 %v47, %v48
  %v50 = vsel %vm38, %v28, 0.0
  %v51 = vadd.f32 %v49, %v50
  %v52 = vsel %vm38, %v29, 0.0
  %v53 = vadd.f32 %v51, %v52
  %v54 = vsel %vm38, %v30, 0.0
  %v55 = vadd.f32 %v53, %v54
  %v56 = vsel %vm38, %v31, 0.0
  %v57 = vadd.f32 %v55, %v56
  %v58 = vsel %vm38, %v32, 0.0
  %v59 = vadd.f32 %v57, %v58
  %v60 = vsel %vm38, %v33, 0.0
  %v61 = vadd.f32 %v59, %v60
  %v62 = vsel %vm38, %v34, 0.0
  %v63 = vadd.f32 %v61, %v62
  %v64 = vsel %vm38, %v35, 0.0
  %v65 = vadd.f32 %v63, %v64
  %v66 = vsel %vm38, %v36, 0.0
  %v67 = vadd.f32 %v65, %v66
  %v68 = vsel %vm38, %v37, 0.0
  %v69 = vadd.f32 %v67, %v68
  %v70 = vrot.slane %v69, 4
  %v71 = vadd.f32 %v69, %v70
  %v72 = vrot.slane %v71, 2
  %v73 = vadd.f32 %v71, %v72
  %v74 = vrot.slane %v73, 1
  %v75 = vadd.f32 %v73, %v74
  %v76 = vmax.f32 %v75, 1.0
  %77 = vadd.xlane.f32.xlu0 %v39
  %v78 = vpop.xlane.xlu0 %77
  %79 = vadd.xlane.f32.xlu0 %v40
  %v80 = vpop.xlane.xlu0 %79
  %81 = vadd.xlane.f32.xlu0 %v42
  %v82 = vpop.xlane.xlu0 %81
  %83 = vadd.xlane.f32.xlu0 %v44
  %v84 = vpop.xlane.xlu0 %83
  %85 = vadd.xlane.f32.xlu0 %v46
  %v86 = vpop.xlane.xlu0 %85
  %87 = vadd.xlane.f32.xlu0 %v48
  %v88 = vpop.xlane.xlu0 %87
  %89 = vadd.xlane.f32.xlu0 %v50
  %v90 = vpop.xlane.xlu0 %89
  %91 = vadd.xlane.f32.xlu0 %v52
  %v92 = vpop.xlane.xlu0 %91
  %93 = vadd.xlane.f32.xlu0 %v54
  %v94 = vpop.xlane.xlu0 %93
  %95 = vadd.xlane.f32.xlu0 %v56
  %v96 = vpop.xlane.xlu0 %95
  %97 = vadd.xlane.f32.xlu0 %v58
  %v98 = vpop.xlane.xlu0 %97
  %99 = vadd.xlane.f32.xlu0 %v60
  %v100 = vpop.xlane.xlu0 %99
  %101 = vadd.xlane.f32.xlu0 %v62
  %v102 = vpop.xlane.xlu0 %101
  %103 = vadd.xlane.f32.xlu0 %v64
  %v104 = vpop.xlane.xlu0 %103
  %105 = vadd.xlane.f32.xlu0 %v66
  %v106 = vpop.xlane.xlu0 %105
  %107 = vadd.xlane.f32.xlu0 %v68
  %v108 = vpop.xlane.xlu0 %107
  %v109 = vmax.f32 %v78, 1.0
  %v110 = vmax.f32 %v80, 1.0
  %v111 = vmax.f32 %v82, 1.0
  %v112 = vmax.f32 %v84, 1.0
  %v113 = vmax.f32 %v86, 1.0
  %v114 = vmax.f32 %v88, 1.0
  %v115 = vmax.f32 %v90, 1.0
  %v116 = vmax.f32 %v92, 1.0
  %v117 = vmax.f32 %v94, 1.0
  %v118 = vmax.f32 %v96, 1.0
  %v119 = vmax.f32 %v98, 1.0
  %v120 = vmax.f32 %v100, 1.0
  %v121 = vmax.f32 %v102, 1.0
  %v122 = vmax.f32 %v104, 1.0
  %v123 = vmax.f32 %v106, 1.0
  %v124 = vmax.f32 %v108, 1.0
  %v125 = vrsqrt.pop %v109
  %v126 = vrsqrt.pop %v110
  %v127 = vrsqrt.pop %v111
  %v128 = vrsqrt.pop %v112
  %v129 = vrsqrt.pop %v113
  %v130 = vrsqrt.pop %v114
  %v131 = vrsqrt.pop %v115
  %v132 = vrsqrt.pop %v116
  %v133 = vrsqrt.pop %v117
  %v134 = vrsqrt.pop %v118
  %v135 = vrsqrt.pop %v119
  %v136 = vrsqrt.pop %v120
  %v137 = vrsqrt.pop %v121
  %v138 = vrsqrt.pop %v122
  %v139 = vrsqrt.pop %v123
  %v140 = vrsqrt.pop %v124
  %v141 = vmul.f32 %v22, %v125
  %v142 = vmul.f32 %v23, %v126
  %v143 = vmul.f32 %v24, %v127
  %v144 = vmul.f32 %v25, %v128
  %v145 = vmul.f32 %v26, %v129
  %v146 = vmul.f32 %v27, %v130
  %v147 = vmul.f32 %v28, %v131
  %v148 = vmul.f32 %v29, %v132
  %v149 = vmul.f32 %v30, %v133
  %v150 = vmul.f32 %v31, %v134
  %v151 = vmul.f32 %v32, %v135
  %v152 = vmul.f32 %v33, %v136
  %v153 = vmul.f32 %v34, %v137
  %v154 = vmul.f32 %v35, %v138
  %v155 = vmul.f32 %v36, %v139
  %v156 = vmul.f32 %v37, %v140
  %v157 = vrsqrt.pop %v76
  %v158 = vmul.f32 %v141, %v157
  %v159 = vmul.f32 %v142, %v157
  %v160 = vmul.f32 %v143, %v157
  %v161 = vmul.f32 %v144, %v157
  %v162 = vmul.f32 %v145, %v157
  %v163 = vmul.f32 %v146, %v157
  %v164 = vmul.f32 %v147, %v157
  %v165 = vmul.f32 %v148, %v157
  %v166 = vmul.f32 %v149, %v157
  %v167 = vmul.f32 %v150, %v157
  %v168 = vmul.f32 %v151, %v157
  %v169 = vmul.f32 %v152, %v157
  %v170 = vmul.f32 %v153, %v157
  %v171 = vmul.f32 %v154, %v157
  %v172 = vmul.f32 %v155, %v157
  %v173 = vmul.f32 %v156, %v157
  %174 = vxpose.xlu0.b32.start [1/16] %v158, 128
  %175 = vxpose.xlu0.b32.cont [2/16] %v159, 128
  %176 = vxpose.xlu0.b32.cont [3/16] %v160, 128
  %177 = vxpose.xlu0.b32.cont [4/16] %v161, 128
  %178 = vxpose.xlu0.b32.cont [5/16] %v162, 128
  %179 = vxpose.xlu0.b32.cont [6/16] %v163, 128
  %180 = vxpose.xlu0.b32.cont [7/16] %v164, 128
  %181 = vxpose.xlu0.b32.cont [8/16] %v165, 128
  %182 = vxpose.xlu0.b32.cont [9/16] %v166, 128
  %183 = vxpose.xlu0.b32.cont [10/16] %v167, 128
  %184 = vxpose.xlu0.b32.cont [11/16] %v168, 128
  %185 = vxpose.xlu0.b32.cont [12/16] %v169, 128
  %186 = vxpose.xlu0.b32.cont [13/16] %v170, 128
  %187 = vxpose.xlu0.b32.cont [14/16] %v171, 128
  %188 = vxpose.xlu0.b32.cont [15/16] %v172, 128
  %189 = vxpose.xlu0.b32.end [16/16] %v173, 128
  %v190 = vpop.trf.xlu0
  %v191 = vpop.trf.xlu0
  %v192 = vpop.trf.xlu0
  %v193 = vpop.trf.xlu0
  %v194 = vpop.trf.xlu0
  %v195 = vpop.trf.xlu0
  %v196 = vpop.trf.xlu0
  %v197 = vpop.trf.xlu0
  %v198 = vpop.trf.xlu0
  %v199 = vpop.trf.xlu0
  %v200 = vpop.trf.xlu0
  %v201 = vpop.trf.xlu0
  %v202 = vpop.trf.xlu0
  %v203 = vpop.trf.xlu0
  %v204 = vpop.trf.xlu0
  %v205 = vpop.trf.xlu0
  %v206 = vld [vmem:[%s1] sm:$0xff]
  %v207 = vld [vmem:[%s1 + $0x8] sm:$0xff]
  %v208 = vld [vmem:[%s1 + $0x10] sm:$0xff]
  %v209 = vld [vmem:[%s1 + $0x18] sm:$0xff]
  %v210 = vld [vmem:[%s1 + $0x20] sm:$0xff]
  %v211 = vld [vmem:[%s1 + $0x28] sm:$0xff]
  %v212 = vld [vmem:[%s1 + $0x30] sm:$0xff]
  %v213 = vld [vmem:[%s1 + $0x38] sm:$0xff]
  %v214 = vld [vmem:[%s1 + $0x40] sm:$0xff]
  %v215 = vld [vmem:[%s1 + $0x48] sm:$0xff]
  %v216 = vld [vmem:[%s1 + $0x50] sm:$0xff]
  %v217 = vld [vmem:[%s1 + $0x58] sm:$0xff]
  %v218 = vld [vmem:[%s1 + $0x60] sm:$0xff]
  %v219 = vld [vmem:[%s1 + $0x68] sm:$0xff]
  %v220 = vld [vmem:[%s1 + $0x70] sm:$0xff]
  %v221 = vld [vmem:[%s1 + $0x78] sm:$0xff]
  %v222 = vld [vmem:[%s1 + $0x80] sm:$0xff]
  %v223 = vld [vmem:[%s2] sm:$0xff]
  %v224 = vld [vmem:[%s2 + $0x8] sm:$0xff]
  %v225 = vld [vmem:[%s3] sm:$0xff]
  %v226 = vld [vmem:[%s3 + $0x8] sm:$0xff]
  %v227 = vld [vmem:[%s3 + $0x10] sm:$0xff]
  %v228 = vld [vmem:[%s3 + $0x18] sm:$0xff]
  %v229 = vld [vmem:[%s4] sm:$0xf]
  %v231 = vsel %vm38, %v158, 0
  %v234 = vsel %vm38, %v159, 0
  %v237 = vsel %vm38, %v160, 0
  %v240 = vsel %vm38, %v161, 0
  %v243 = vsel %vm38, %v162, 0
  %v246 = vsel %vm38, %v163, 0
  %v249 = vsel %vm38, %v164, 0
  %v252 = vsel %vm38, %v165, 0
  %v255 = vsel %vm38, %v166, 0
  %v258 = vsel %vm38, %v167, 0
  %v261 = vsel %vm38, %v168, 0
  %v264 = vsel %vm38, %v169, 0
  %v267 = vsel %vm38, %v170, 0
  %v270 = vsel %vm38, %v171, 0
  %v273 = vsel %vm38, %v172, 0
  %v276 = vsel %vm38, %v173, 0
  %278 = vmatprep.subr.mxu0 0.0
  %279 = vmatpush1.msra.mxu0 %v206
  %280 = vmatprep.subr.mxu0 0.0
  %281 = vmatpush1.msra.mxu0 0.0
  %282 = vmatprep.subr.mxu0 0.0
  %283 = vmatpush1.msra.mxu0 0.0
  %284 = vmatprep.subr.mxu0 0.0
  %285 = vmatpush1.msra.mxu0 0.0
  %286 = vmatprep.subr.mxu0 0.0
  %287 = vmatpush1.msra.mxu0 0.0
  %288 = vmatprep.subr.mxu0 0.0
  %289 = vmatpush1.msra.mxu0 0.0
  %290 = vmatprep.subr.mxu0 0.0
  %291 = vmatpush1.msra.mxu0 0.0
  %292 = vmatprep.subr.mxu0 0.0
  %293 = vmatpush1.msra.mxu0 0.0
  %294 = vmatprep.subr.mxu0 0.0
  %295 = vmatpush1.msra.mxu0 0.0
  %296 = vmatprep.subr.mxu0 0.0
  %297 = vmatpush1.msra.mxu0 0.0
  %298 = vmatprep.subr.mxu0 0.0
  %299 = vmatpush1.msra.mxu0 0.0
  %300 = vmatprep.subr.mxu0 0.0
  %301 = vmatpush1.msra.mxu0 0.0
  %302 = vmatprep.subr.mxu0 0.0
  %303 = vmatpush1.msra.mxu0 0.0
  %304 = vmatprep.subr.mxu0 0.0
  %305 = vmatpush1.msra.mxu0 0.0
  %306 = vmatprep.subr.mxu0 0.0
  %307 = vmatpush1.msra.mxu0 0.0
  %308 = vmatprep.subr.mxu0 0.0
  %309 = vmatpush1.msra.mxu0 0.0
  %310 = vmatprep.subr.mxu0 0.0
  %311 = vmatpush1.msra.mxu0 0.0
  %312 = vmatprep.subr.mxu0 0.0
  %313 = vmatpush1.msra.mxu0 0.0
  %314 = vmatprep.subr.mxu0 0.0
  %315 = vmatpush1.msra.mxu0 0.0
  %316 = vmatprep.subr.mxu0 0.0
  %317 = vmatpush1.msra.mxu0 0.0
  %318 = vmatprep.subr.mxu0 0.0
  %319 = vmatpush1.msra.mxu0 0.0
  %320 = vmatprep.subr.mxu0 0.0
  %321 = vmatpush1.msra.mxu0 0.0
  %322 = vmatprep.subr.mxu0 0.0
  %323 = vmatpush1.msra.mxu0 0.0
  %324 = vmatprep.subr.mxu0 0.0
  %325 = vmatpush1.msra.mxu0 0.0
  %326 = vmatprep.subr.mxu0 0.0
  %327 = vmatpush1.msra.mxu0 0.0
  %328 = vmatprep.subr.mxu0 0.0
  %329 = vmatpush1.msra.mxu0 0.0
  %330 = vmatprep.subr.mxu0 0.0
  %331 = vmatpush1.msra.mxu0 0.0
  %332 = vmatprep.subr.mxu0 0.0
  %333 = vmatpush1.msra.mxu0 0.0
  %334 = vmatprep.subr.mxu0 0.0
  %335 = vmatpush1.msra.mxu0 0.0
  %336 = vmatprep.subr.mxu0 0.0
  %337 = vmatpush1.msra.mxu0 0.0
  %338 = vmatprep.subr.mxu0 0.0
  %339 = vmatpush1.msra.mxu0 0.0
  %340 = vmatprep.subr.mxu0 0.0
  %341 = vmatpush1.msra.mxu0 0.0
  %342 = vmatprep.mubr.f32.mxu0 0.0
  %343 = vmatmul.mubr.f32.gmra.mrb[0].mxu0 %v231
  %v344 = vpop.f32.mrb[0].mxu0
  %v345 = vadd.f32 0.0, %v344
  %v346 = vpop.f32.mrb[0].mxu0
  %347 = vmatprep.mubr.f32.mxu0 0.0
  %348 = vmatmul.mubr.f32.gmra.mrb[0].mxu0 %v234
  %v349 = vpop.f32.mrb[0].mxu0
  %v350 = vadd.f32 0.0, %v349
  %v351 = vpop.f32.mrb[0].mxu0
  %352 = vmatprep.mubr.f32.mxu0 0.0
  %353 = vmatmul.mubr.f32.gmra.mrb[0].mxu0 %v237
  %v354 = vpop.f32.mrb[0].mxu0
  %v355 = vadd.f32 0.0, %v354
  %v356 = vpop.f32.mrb[0].mxu0
  %357 = vmatprep.mubr.f32.mxu0 0.0
  %358 = vmatmul.mubr.f32.gmra.mrb[0].mxu0 %v240
  %v359 = vpop.f32.mrb[0].mxu0
  %v360 = vadd.f32 0.0, %v359
  %v361 = vpop.f32.mrb[0].mxu0
  %362 = vmatprep.mubr.f32.mxu0 0.0
  %363 = vmatmul.mubr.f32.gmra.mrb[0].mxu0 %v243
  %v364 = vpop.f32.mrb[0].mxu0
  %v365 = vadd.f32 0.0, %v364
  %v366 = vpop.f32.mrb[0].mxu0
  %367 = vmatprep.mubr.f32.mxu0 0.0
  %368 = vmatmul.mubr.f32.gmra.mrb[0].mxu0 %v246
  %v369 = vpop.f32.mrb[0].mxu0
  %v370 = vadd.f32 0.0, %v369
  %v371 = vpop.f32.mrb[0].mxu0
  %372 = vmatprep.mubr.f32.mxu0 0.0
  %373 = vmatmul.mubr.f32.gmra.mrb[0].mxu0 %v249
  %v374 = vpop.f32.mrb[0].mxu0
  %v375 = vadd.f32 0.0, %v374
  %v376 = vpop.f32.mrb[0].mxu0
  %377 = vmatprep.mubr.f32.mxu0 0.0
  %378 = vmatmul.mubr.f32.gmra.mrb[0].mxu0 %v252
  %v379 = vpop.f32.mrb[0].mxu0
  %v380 = vadd.f32 0.0, %v379
  %v381 = vpop.f32.mrb[0].mxu0
  %382 = vmatprep.mubr.f32.mxu0 0.0
  %383 = vmatmul.mubr.f32.gmra.mrb[0].mxu0 %v255
  %v384 = vpop.f32.mrb[0].mxu0
  %v385 = vadd.f32 0.0, %v384
  %v386 = vpop.f32.mrb[0].mxu0
  %387 = vmatprep.mubr.f32.mxu0 0.0
  %388 = vmatmul.mubr.f32.gmra.mrb[0].mxu0 %v258
  %v389 = vpop.f32.mrb[0].mxu0
  %v390 = vadd.f32 0.0, %v389
  %v391 = vpop.f32.mrb[0].mxu0
  %392 = vmatprep.mubr.f32.mxu0 0.0
  %393 = vmatmul.mubr.f32.gmra.mrb[0].mxu0 %v261
  %v394 = vpop.f32.mrb[0].mxu0
  %v395 = vadd.f32 0.0, %v394
  %v396 = vpop.f32.mrb[0].mxu0
  %397 = vmatprep.mubr.f32.mxu0 0.0
  %398 = vmatmul.mubr.f32.gmra.mrb[0].mxu0 %v264
  %v399 = vpop.f32.mrb[0].mxu0
  %v400 = vadd.f32 0.0, %v399
  %v401 = vpop.f32.mrb[0].mxu0
  %402 = vmatprep.mubr.f32.mxu0 0.0
  %403 = vmatmul.mubr.f32.gmra.mrb[0].mxu0 %v267
  %v404 = vpop.f32.mrb[0].mxu0
  %v405 = vadd.f32 0.0, %v404
  %v406 = vpop.f32.mrb[0].mxu0
  %407 = vmatprep.mubr.f32.mxu0 0.0
  %408 = vmatmul.mubr.f32.gmra.mrb[0].mxu0 %v270
  %v409 = vpop.f32.mrb[0].mxu0
  %v410 = vadd.f32 0.0, %v409
  %v411 = vpop.f32.mrb[0].mxu0
  %412 = vmatprep.mubr.f32.mxu0 0.0
  %413 = vmatmul.mubr.f32.gmra.mrb[0].mxu0 %v273
  %v414 = vpop.f32.mrb[0].mxu0
  %v415 = vadd.f32 0.0, %v414
  %v416 = vpop.f32.mrb[0].mxu0
  %417 = vmatprep.mubr.f32.mxu0 0.0
  %418 = vmatmul.mubr.f32.gmra.mrb[0].mxu0 %v276
  %v419 = vpop.f32.mrb[0].mxu0
  %v420 = vadd.f32 0.0, %v419
  %v421 = vpop.f32.mrb[0].mxu0
  %422 = vdwg.mxu0
  %v423 = vlaneseq
  %v424 = vshrl.u32 %v423, 7
  %v425 = vsub.s32 0, %v424
  %v426 = vrot.slane %v229, %v425
  %vm427 = vcmask 130048
  %v429 = vsel %vm427, %v345, 0
  %v432 = vsel %vm427, %v350, 0
  %v435 = vsel %vm427, %v355, 0
  %v438 = vsel %vm427, %v360, 0
  %v441 = vsel %vm427, %v365, 0
  %v444 = vsel %vm427, %v370, 0
  %v447 = vsel %vm427, %v375, 0
  %v450 = vsel %vm427, %v380, 0
  %v453 = vsel %vm427, %v385, 0
  %v456 = vsel %vm427, %v390, 0
  %v459 = vsel %vm427, %v395, 0
  %v462 = vsel %vm427, %v400, 0
  %v465 = vsel %vm427, %v405, 0
  %v468 = vsel %vm427, %v410, 0
  %v471 = vsel %vm427, %v415, 0
  %v474 = vsel %vm427, %v420, 0
  %476 = vmatprep.subr.mxu0 0.0
  %477 = vmatpush1.msra.mxu0 %v223
  %478 = vmatprep.subr.mxu0 0.0
  %479 = vmatpush1.msra.mxu0 %v224
  %480 = vmatprep.subr.mxu0 0.0
  %481 = vmatpush1.msra.mxu0 0.0
  %482 = vmatprep.subr.mxu0 0.0
  %483 = vmatpush1.msra.mxu0 0.0
  %484 = vmatprep.subr.mxu0 0.0
  %485 = vmatpush1.msra.mxu0 0.0
  %486 = vmatprep.subr.mxu0 0.0
  %487 = vmatpush1.msra.mxu0 0.0
  %488 = vmatprep.subr.mxu0 0.0
  %489 = vmatpush1.msra.mxu0 0.0
  %490 = vmatprep.subr.mxu0 0.0
  %491 = vmatpush1.msra.mxu0 0.0
  %492 = vmatprep.subr.mxu0 0.0
  %493 = vmatpush1.msra.mxu0 0.0
  %494 = vmatprep.subr.mxu0 0.0
  %495 = vmatpush1.msra.mxu0 0.0
  %496 = vmatprep.subr.mxu0 0.0
  %497 = vmatpush1.msra.mxu0 0.0
  %498 = vmatprep.subr.mxu0 0.0
  %499 = vmatpush1.msra.mxu0 0.0
  %500 = vmatprep.subr.mxu0 0.0
  %501 = vmatpush1.msra.mxu0 0.0
  %502 = vmatprep.subr.mxu0 0.0
  %503 = vmatpush1.msra.mxu0 0.0
  %504 = vmatprep.subr.mxu0 0.0
  %505 = vmatpush1.msra.mxu0 0.0
  %506 = vmatprep.subr.mxu0 0.0
  %507 = vmatpush1.msra.mxu0 0.0
  %508 = vmatprep.subr.mxu0 0.0
  %509 = vmatpush1.msra.mxu0 0.0
  %510 = vmatprep.subr.mxu0 0.0
  %511 = vmatpush1.msra.mxu0 0.0
  %512 = vmatprep.subr.mxu0 0.0
  %513 = vmatpush1.msra.mxu0 0.0
  %514 = vmatprep.subr.mxu0 0.0
  %515 = vmatpush1.msra.mxu0 0.0
  %516 = vmatprep.subr.mxu0 0.0
  %517 = vmatpush1.msra.mxu0 0.0
  %518 = vmatprep.subr.mxu0 0.0
  %519 = vmatpush1.msra.mxu0 0.0
  %520 = vmatprep.subr.mxu0 0.0
  %521 = vmatpush1.msra.mxu0 0.0
  %522 = vmatprep.subr.mxu0 0.0
  %523 = vmatpush1.msra.mxu0 0.0
  %524 = vmatprep.subr.mxu0 0.0
  %525 = vmatpush1.msra.mxu0 0.0
  %526 = vmatprep.subr.mxu0 0.0
  %527 = vmatpush1.msra.mxu0 0.0
  %528 = vmatprep.subr.mxu0 0.0
  %529 = vmatpush1.msra.mxu0 0.0
  %530 = vmatprep.subr.mxu0 0.0
  %531 = vmatpush1.msra.mxu0 0.0
  %532 = vmatprep.subr.mxu0 0.0
  %533 = vmatpush1.msra.mxu0 0.0
  %534 = vmatprep.subr.mxu0 0.0
  %535 = vmatpush1.msra.mxu0 0.0
  %536 = vmatprep.subr.mxu0 0.0
  %537 = vmatpush1.msra.mxu0 0.0
  %538 = vmatprep.subr.mxu0 0.0
  %539 = vmatpush1.msra.mxu0 0.0
  %540 = vmatprep.mubr.f32.mxu0 0.0
  %541 = vmatmul.mubr.f32.gmra.mrb[0].mxu0 %v429
  %v542 = vpop.f32.mrb[0].mxu0
  %v543 = vadd.f32 %v426, %v542
  %v544 = vpop.f32.mrb[0].mxu0
  %545 = vmatprep.mubr.f32.mxu0 0.0
  %546 = vmatmul.mubr.f32.gmra.mrb[0].mxu0 %v432
  %v547 = vpop.f32.mrb[0].mxu0
  %v548 = vadd.f32 %v426, %v547
  %v549 = vpop.f32.mrb[0].mxu0
  %550 = vmatprep.mubr.f32.mxu0 0.0
  %551 = vmatmul.mubr.f32.gmra.mrb[0].mxu0 %v435
  %v552 = vpop.f32.mrb[0].mxu0
  %v553 = vadd.f32 %v426, %v552
  %v554 = vpop.f32.mrb[0].mxu0
  %555 = vmatprep.mubr.f32.mxu0 0.0
  %556 = vmatmul.mubr.f32.gmra.mrb[0].mxu0 %v438
  %v557 = vpop.f32.mrb[0].mxu0
  %v558 = vadd.f32 %v426, %v557
  %v559 = vpop.f32.mrb[0].mxu0
  %560 = vmatprep.mubr.f32.mxu0 0.0
  %561 = vmatmul.mubr.f32.gmra.mrb[0].mxu0 %v441
  %v562 = vpop.f32.mrb[0].mxu0
  %v563 = vadd.f32 %v426, %v562
  %v564 = vpop.f32.mrb[0].mxu0
  %565 = vmatprep.mubr.f32.mxu0 0.0
  %566 = vmatmul.mubr.f32.gmra.mrb[0].mxu0 %v444
  %v567 = vpop.f32.mrb[0].mxu0
  %v568 = vadd.f32 %v426, %v567
  %v569 = vpop.f32.mrb[0].mxu0
  %570 = vmatprep.mubr.f32.mxu0 0.0
  %571 = vmatmul.mubr.f32.gmra.mrb[0].mxu0 %v447
  %v572 = vpop.f32.mrb[0].mxu0
  %v573 = vadd.f32 %v426, %v572
  %v574 = vpop.f32.mrb[0].mxu0
  %575 = vmatprep.mubr.f32.mxu0 0.0
  %576 = vmatmul.mubr.f32.gmra.mrb[0].mxu0 %v450
  %v577 = vpop.f32.mrb[0].mxu0
  %v578 = vadd.f32 %v426, %v577
  %v579 = vpop.f32.mrb[0].mxu0
  %580 = vmatprep.mubr.f32.mxu0 0.0
  %581 = vmatmul.mubr.f32.gmra.mrb[0].mxu0 %v453
  %v582 = vpop.f32.mrb[0].mxu0
  %v583 = vadd.f32 %v426, %v582
  %v584 = vpop.f32.mrb[0].mxu0
  %585 = vmatprep.mubr.f32.mxu0 0.0
  %586 = vmatmul.mubr.f32.gmra.mrb[0].mxu0 %v456
  %v587 = vpop.f32.mrb[0].mxu0
  %v588 = vadd.f32 %v426, %v587
  %v589 = vpop.f32.mrb[0].mxu0
  %590 = vmatprep.mubr.f32.mxu0 0.0
  %591 = vmatmul.mubr.f32.gmra.mrb[0].mxu0 %v459
  %v592 = vpop.f32.mrb[0].mxu0
  %v593 = vadd.f32 %v426, %v592
  %v594 = vpop.f32.mrb[0].mxu0
  %595 = vmatprep.mubr.f32.mxu0 0.0
  %596 = vmatmul.mubr.f32.gmra.mrb[0].mxu0 %v462
  %v597 = vpop.f32.mrb[0].mxu0
  %v598 = vadd.f32 %v426, %v597
  %v599 = vpop.f32.mrb[0].mxu0
  %600 = vmatprep.mubr.f32.mxu0 0.0
  %601 = vmatmul.mubr.f32.gmra.mrb[0].mxu0 %v465
  %v602 = vpop.f32.mrb[0].mxu0
  %v603 = vadd.f32 %v426, %v602
  %v604 = vpop.f32.mrb[0].mxu0
  %605 = vmatprep.mubr.f32.mxu0 0.0
  %606 = vmatmul.mubr.f32.gmra.mrb[0].mxu0 %v468
  %v607 = vpop.f32.mrb[0].mxu0
  %v608 = vadd.f32 %v426, %v607
  %v609 = vpop.f32.mrb[0].mxu0
  %610 = vmatprep.mubr.f32.mxu0 0.0
  %611 = vmatmul.mubr.f32.gmra.mrb[0].mxu0 %v471
  %v612 = vpop.f32.mrb[0].mxu0
  %v613 = vadd.f32 %v426, %v612
  %v614 = vpop.f32.mrb[0].mxu0
  %615 = vmatprep.mubr.f32.mxu0 0.0
  %616 = vmatmul.mubr.f32.gmra.mrb[0].mxu0 %v474
  %v617 = vpop.f32.mrb[0].mxu0
  %v618 = vadd.f32 %v426, %v617
  %v619 = vpop.f32.mrb[0].mxu0
  %620 = vdwg.mxu0
  %v621 = vmax.f32 %v543, 0.0
  %v622 = vmax.f32 %v548, 0.0
  %v623 = vmax.f32 %v553, 0.0
  %v624 = vmax.f32 %v558, 0.0
  %v625 = vmax.f32 %v563, 0.0
  %v626 = vmax.f32 %v568, 0.0
  %v627 = vmax.f32 %v573, 0.0
  %v628 = vmax.f32 %v578, 0.0
  %v629 = vmax.f32 %v583, 0.0
  %v630 = vmax.f32 %v588, 0.0
  %v631 = vmax.f32 %v593, 0.0
  %v632 = vmax.f32 %v598, 0.0
  %v633 = vmax.f32 %v603, 0.0
  %v634 = vmax.f32 %v608, 0.0
  %v635 = vmax.f32 %v613, 0.0
  %v636 = vmax.f32 %v618, 0.0
  %637 = vmatprep.subr.mxu0 0.0
  %638 = vmatpush1.msra.mxu0 %v207
  %639 = vmatprep.subr.mxu0 0.0
  %640 = vmatpush1.msra.mxu0 %v208
  %641 = vmatprep.subr.mxu0 0.0
  %642 = vmatpush1.msra.mxu0 %v209
  %643 = vmatprep.subr.mxu0 0.0
  %644 = vmatpush1.msra.mxu0 %v210
  %645 = vmatprep.subr.mxu0 0.0
  %646 = vmatpush1.msra.mxu0 %v211
  %647 = vmatprep.subr.mxu0 0.0
  %648 = vmatpush1.msra.mxu0 %v212
  %649 = vmatprep.subr.mxu0 0.0
  %650 = vmatpush1.msra.mxu0 %v213
  %651 = vmatprep.subr.mxu0 0.0
  %652 = vmatpush1.msra.mxu0 %v214
  %653 = vmatprep.subr.mxu0 0.0
  %654 = vmatpush1.msra.mxu0 %v215
  %655 = vmatprep.subr.mxu0 0.0
  %656 = vmatpush1.msra.mxu0 %v216
  %657 = vmatprep.subr.mxu0 0.0
  %658 = vmatpush1.msra.mxu0 %v217
  %659 = vmatprep.subr.mxu0 0.0
  %660 = vmatpush1.msra.mxu0 %v218
  %661 = vmatprep.subr.mxu0 0.0
  %662 = vmatpush1.msra.mxu0 %v219
  %663 = vmatprep.subr.mxu0 0.0
  %664 = vmatpush1.msra.mxu0 %v220
  %665 = vmatprep.subr.mxu0 0.0
  %666 = vmatpush1.msra.mxu0 %v221
  %667 = vmatprep.subr.mxu0 0.0
  %668 = vmatpush1.msra.mxu0 %v222
  %669 = vmatprep.subr.mxu0 0.0
  %670 = vmatpush1.msra.mxu0 0.0
  %671 = vmatprep.subr.mxu0 0.0
  %672 = vmatpush1.msra.mxu0 0.0
  %673 = vmatprep.subr.mxu0 0.0
  %674 = vmatpush1.msra.mxu0 0.0
  %675 = vmatprep.subr.mxu0 0.0
  %676 = vmatpush1.msra.mxu0 0.0
  %677 = vmatprep.subr.mxu0 0.0
  %678 = vmatpush1.msra.mxu0 0.0
  %679 = vmatprep.subr.mxu0 0.0
  %680 = vmatpush1.msra.mxu0 0.0
  %681 = vmatprep.subr.mxu0 0.0
  %682 = vmatpush1.msra.mxu0 0.0
  %683 = vmatprep.subr.mxu0 0.0
  %684 = vmatpush1.msra.mxu0 0.0
  %685 = vmatprep.subr.mxu0 0.0
  %686 = vmatpush1.msra.mxu0 0.0
  %687 = vmatprep.subr.mxu0 0.0
  %688 = vmatpush1.msra.mxu0 0.0
  %689 = vmatprep.subr.mxu0 0.0
  %690 = vmatpush1.msra.mxu0 0.0
  %691 = vmatprep.subr.mxu0 0.0
  %692 = vmatpush1.msra.mxu0 0.0
  %693 = vmatprep.subr.mxu0 0.0
  %694 = vmatpush1.msra.mxu0 0.0
  %695 = vmatprep.subr.mxu0 0.0
  %696 = vmatpush1.msra.mxu0 0.0
  %697 = vmatprep.subr.mxu0 0.0
  %698 = vmatpush1.msra.mxu0 0.0
  %699 = vmatprep.subr.mxu0 0.0
  %700 = vmatpush1.msra.mxu0 0.0
  %701 = vmatprep.mubr.f32.mxu0 0.0
  %702 = vmatmul.mubr.f32.gmra.mrb[0].mxu0 %v190
  %v703 = vpop.f32.mrb[0].mxu0
  %v704 = vadd.f32 0.0, %v703
  %v705 = vpop.f32.mrb[0].mxu0
  %706 = vdwg.mxu0
  %v707 = vlaneseq
  %v708 = vshrl.u32 %v707, 7
  %v709 = vsub.s32 1, %v708
  %v710 = vrot.slane %v229, %v709
  %713 = vrot.lane.b32.xlu0 %v223, 96
  %v714 = vpop.permute.xlu0 %713
  %715 = vrot.lane.b32.xlu0 %v224, 96
  %v716 = vpop.permute.xlu0 %715
  %v720 = vsel %vm427, %v704, 0
  %722 = vmatprep.subr.mxu0 0.0
  %723 = vmatpush1.msra.mxu0 %v714
  %724 = vmatprep.subr.mxu0 0.0
  %725 = vmatpush1.msra.mxu0 %v716
  %726 = vmatprep.subr.mxu0 0.0
  %727 = vmatpush1.msra.mxu0 0.0
  %728 = vmatprep.subr.mxu0 0.0
  %729 = vmatpush1.msra.mxu0 0.0
  %730 = vmatprep.subr.mxu0 0.0
  %731 = vmatpush1.msra.mxu0 0.0
  %732 = vmatprep.subr.mxu0 0.0
  %733 = vmatpush1.msra.mxu0 0.0
  %734 = vmatprep.subr.mxu0 0.0
  %735 = vmatpush1.msra.mxu0 0.0
  %736 = vmatprep.subr.mxu0 0.0
  %737 = vmatpush1.msra.mxu0 0.0
  %738 = vmatprep.subr.mxu0 0.0
  %739 = vmatpush1.msra.mxu0 0.0
  %740 = vmatprep.subr.mxu0 0.0
  %741 = vmatpush1.msra.mxu0 0.0
  %742 = vmatprep.subr.mxu0 0.0
  %743 = vmatpush1.msra.mxu0 0.0
  %744 = vmatprep.subr.mxu0 0.0
  %745 = vmatpush1.msra.mxu0 0.0
  %746 = vmatprep.subr.mxu0 0.0
  %747 = vmatpush1.msra.mxu0 0.0
  %748 = vmatprep.subr.mxu0 0.0
  %749 = vmatpush1.msra.mxu0 0.0
  %750 = vmatprep.subr.mxu0 0.0
  %751 = vmatpush1.msra.mxu0 0.0
  %752 = vmatprep.subr.mxu0 0.0
  %753 = vmatpush1.msra.mxu0 0.0
  %754 = vmatprep.subr.mxu0 0.0
  %755 = vmatpush1.msra.mxu0 0.0
  %756 = vmatprep.subr.mxu0 0.0
  %757 = vmatpush1.msra.mxu0 0.0
  %758 = vmatprep.subr.mxu0 0.0
  %759 = vmatpush1.msra.mxu0 0.0
  %760 = vmatprep.subr.mxu0 0.0
  %761 = vmatpush1.msra.mxu0 0.0
  %762 = vmatprep.subr.mxu0 0.0
  %763 = vmatpush1.msra.mxu0 0.0
  %764 = vmatprep.subr.mxu0 0.0
  %765 = vmatpush1.msra.mxu0 0.0
  %766 = vmatprep.subr.mxu0 0.0
  %767 = vmatpush1.msra.mxu0 0.0
  %768 = vmatprep.subr.mxu0 0.0
  %769 = vmatpush1.msra.mxu0 0.0
  %770 = vmatprep.subr.mxu0 0.0
  %771 = vmatpush1.msra.mxu0 0.0
  %772 = vmatprep.subr.mxu0 0.0
  %773 = vmatpush1.msra.mxu0 0.0
  %774 = vmatprep.subr.mxu0 0.0
  %775 = vmatpush1.msra.mxu0 0.0
  %776 = vmatprep.subr.mxu0 0.0
  %777 = vmatpush1.msra.mxu0 0.0
  %778 = vmatprep.subr.mxu0 0.0
  %779 = vmatpush1.msra.mxu0 0.0
  %780 = vmatprep.subr.mxu0 0.0
  %781 = vmatpush1.msra.mxu0 0.0
  %782 = vmatprep.subr.mxu0 0.0
  %783 = vmatpush1.msra.mxu0 0.0
  %784 = vmatprep.subr.mxu0 0.0
  %785 = vmatpush1.msra.mxu0 0.0
  %786 = vmatprep.mubr.f32.mxu0 0.0
  %787 = vmatmul.mubr.f32.gmra.mrb[0].mxu0 %v720
  %v788 = vpop.f32.mrb[0].mxu0
  %v789 = vadd.f32 %v710, %v788
  %v790 = vpop.f32.mrb[0].mxu0
  %791 = vdwg.mxu0
  %v792 = vmax.f32 %v789, 0.0
  %793 = vmatprep.subr.mxu0 0.0
  %794 = vmatpush1.msra.mxu0 %v792
  %795 = vmatprep.subr.mxu0 0.0
  %796 = vmatpush1.msra.mxu0 0.0
  %797 = vmatprep.subr.mxu0 0.0
  %798 = vmatpush1.msra.mxu0 0.0
  %799 = vmatprep.subr.mxu0 0.0
  %800 = vmatpush1.msra.mxu0 0.0
  %801 = vmatprep.subr.mxu0 0.0
  %802 = vmatpush1.msra.mxu0 0.0
  %803 = vmatprep.subr.mxu0 0.0
  %804 = vmatpush1.msra.mxu0 0.0
  %805 = vmatprep.subr.mxu0 0.0
  %806 = vmatpush1.msra.mxu0 0.0
  %807 = vmatprep.subr.mxu0 0.0
  %808 = vmatpush1.msra.mxu0 0.0
  %809 = vmatprep.subr.mxu0 0.0
  %810 = vmatpush1.msra.mxu0 0.0
  %811 = vmatprep.subr.mxu0 0.0
  %812 = vmatpush1.msra.mxu0 0.0
  %813 = vmatprep.subr.mxu0 0.0
  %814 = vmatpush1.msra.mxu0 0.0
  %815 = vmatprep.subr.mxu0 0.0
  %816 = vmatpush1.msra.mxu0 0.0
  %817 = vmatprep.subr.mxu0 0.0
  %818 = vmatpush1.msra.mxu0 0.0
  %819 = vmatprep.subr.mxu0 0.0
  %820 = vmatpush1.msra.mxu0 0.0
  %821 = vmatprep.subr.mxu0 0.0
  %822 = vmatpush1.msra.mxu0 0.0
  %823 = vmatprep.subr.mxu0 0.0
  %824 = vmatpush1.msra.mxu0 0.0
  %825 = vmatprep.subr.mxu0 0.0
  %826 = vmatpush1.msra.mxu0 0.0
  %827 = vmatprep.subr.mxu0 0.0
  %828 = vmatpush1.msra.mxu0 0.0
  %829 = vmatprep.subr.mxu0 0.0
  %830 = vmatpush1.msra.mxu0 0.0
  %831 = vmatprep.subr.mxu0 0.0
  %832 = vmatpush1.msra.mxu0 0.0
  %833 = vmatprep.subr.mxu0 0.0
  %834 = vmatpush1.msra.mxu0 0.0
  %835 = vmatprep.subr.mxu0 0.0
  %836 = vmatpush1.msra.mxu0 0.0
  %837 = vmatprep.subr.mxu0 0.0
  %838 = vmatpush1.msra.mxu0 0.0
  %839 = vmatprep.subr.mxu0 0.0
  %840 = vmatpush1.msra.mxu0 0.0
  %841 = vmatprep.subr.mxu0 0.0
  %842 = vmatpush1.msra.mxu0 0.0
  %843 = vmatprep.subr.mxu0 0.0
  %844 = vmatpush1.msra.mxu0 0.0
  %845 = vmatprep.subr.mxu0 0.0
  %846 = vmatpush1.msra.mxu0 0.0
  %847 = vmatprep.subr.mxu0 0.0
  %848 = vmatpush1.msra.mxu0 0.0
  %849 = vmatprep.subr.mxu0 0.0
  %850 = vmatpush1.msra.mxu0 0.0
  %851 = vmatprep.subr.mxu0 0.0
  %852 = vmatpush1.msra.mxu0 0.0
  %853 = vmatprep.subr.mxu0 0.0
  %854 = vmatpush1.msra.mxu0 0.0
  %855 = vmatprep.subr.mxu0 0.0
  %856 = vmatpush1.msra.mxu0 0.0
  %857 = vmatprep.mubr.f32.mxu0 0.0
  %858 = vmatmul.mubr.f32.gmra.mrb[0].mxu0 %v231
  %v859 = vpop.f32.mrb[0].mxu0
  %v860 = vadd.f32 0.0, %v859
  %v861 = vpop.f32.mrb[0].mxu0
  %862 = vmatprep.mubr.f32.mxu0 0.0
  %863 = vmatmul.mubr.f32.gmra.mrb[0].mxu0 %v234
  %v864 = vpop.f32.mrb[0].mxu0
  %v865 = vadd.f32 0.0, %v864
  %v866 = vpop.f32.mrb[0].mxu0
  %867 = vmatprep.mubr.f32.mxu0 0.0
  %868 = vmatmul.mubr.f32.gmra.mrb[0].mxu0 %v237
  %v869 = vpop.f32.mrb[0].mxu0
  %v870 = vadd.f32 0.0, %v869
  %v871 = vpop.f32.mrb[0].mxu0
  %872 = vmatprep.mubr.f32.mxu0 0.0
  %873 = vmatmul.mubr.f32.gmra.mrb[0].mxu0 %v240
  %v874 = vpop.f32.mrb[0].mxu0
  %v875 = vadd.f32 0.0, %v874
  %v876 = vpop.f32.mrb[0].mxu0
  %877 = vmatprep.mubr.f32.mxu0 0.0
  %878 = vmatmul.mubr.f32.gmra.mrb[0].mxu0 %v243
  %v879 = vpop.f32.mrb[0].mxu0
  %v880 = vadd.f32 0.0, %v879
  %v881 = vpop.f32.mrb[0].mxu0
  %882 = vmatprep.mubr.f32.mxu0 0.0
  %883 = vmatmul.mubr.f32.gmra.mrb[0].mxu0 %v246
  %v884 = vpop.f32.mrb[0].mxu0
  %v885 = vadd.f32 0.0, %v884
  %v886 = vpop.f32.mrb[0].mxu0
  %887 = vmatprep.mubr.f32.mxu0 0.0
  %888 = vmatmul.mubr.f32.gmra.mrb[0].mxu0 %v249
  %v889 = vpop.f32.mrb[0].mxu0
  %v890 = vadd.f32 0.0, %v889
  %v891 = vpop.f32.mrb[0].mxu0
  %892 = vmatprep.mubr.f32.mxu0 0.0
  %893 = vmatmul.mubr.f32.gmra.mrb[0].mxu0 %v252
  %v894 = vpop.f32.mrb[0].mxu0
  %v895 = vadd.f32 0.0, %v894
  %v896 = vpop.f32.mrb[0].mxu0
  %897 = vmatprep.mubr.f32.mxu0 0.0
  %898 = vmatmul.mubr.f32.gmra.mrb[0].mxu0 %v255
  %v899 = vpop.f32.mrb[0].mxu0
  %v900 = vadd.f32 0.0, %v899
  %v901 = vpop.f32.mrb[0].mxu0
  %902 = vmatprep.mubr.f32.mxu0 0.0
  %903 = vmatmul.mubr.f32.gmra.mrb[0].mxu0 %v258
  %v904 = vpop.f32.mrb[0].mxu0
  %v905 = vadd.f32 0.0, %v904
  %v906 = vpop.f32.mrb[0].mxu0
  %907 = vmatprep.mubr.f32.mxu0 0.0
  %908 = vmatmul.mubr.f32.gmra.mrb[0].mxu0 %v261
  %v909 = vpop.f32.mrb[0].mxu0
  %v910 = vadd.f32 0.0, %v909
  %v911 = vpop.f32.mrb[0].mxu0
  %912 = vmatprep.mubr.f32.mxu0 0.0
  %913 = vmatmul.mubr.f32.gmra.mrb[0].mxu0 %v264
  %v914 = vpop.f32.mrb[0].mxu0
  %v915 = vadd.f32 0.0, %v914
  %v916 = vpop.f32.mrb[0].mxu0
  %917 = vmatprep.mubr.f32.mxu0 0.0
  %918 = vmatmul.mubr.f32.gmra.mrb[0].mxu0 %v267
  %v919 = vpop.f32.mrb[0].mxu0
  %v920 = vadd.f32 0.0, %v919
  %v921 = vpop.f32.mrb[0].mxu0
  %922 = vmatprep.mubr.f32.mxu0 0.0
  %923 = vmatmul.mubr.f32.gmra.mrb[0].mxu0 %v270
  %v924 = vpop.f32.mrb[0].mxu0
  %v925 = vadd.f32 0.0, %v924
  %v926 = vpop.f32.mrb[0].mxu0
  %927 = vmatprep.mubr.f32.mxu0 0.0
  %928 = vmatmul.mubr.f32.gmra.mrb[0].mxu0 %v273
  %v929 = vpop.f32.mrb[0].mxu0
  %v930 = vadd.f32 0.0, %v929
  %v931 = vpop.f32.mrb[0].mxu0
  %932 = vmatprep.mubr.f32.mxu0 0.0
  %933 = vmatmul.mubr.f32.gmra.mrb[0].mxu0 %v276
  %v934 = vpop.f32.mrb[0].mxu0
  %v935 = vadd.f32 0.0, %v934
  %v936 = vpop.f32.mrb[0].mxu0
  %937 = vdwg.mxu0
  %v938 = vlaneseq
  %v939 = vshrl.u32 %v938, 7
  %v940 = vsub.s32 2, %v939
  %v941 = vrot.slane %v229, %v940
  %vm942 = vcmask 261120
  %v944 = vsel %vm942, %v860, 0
  %v947 = vsel %vm942, %v865, 0
  %v950 = vsel %vm942, %v870, 0
  %v953 = vsel %vm942, %v875, 0
  %v956 = vsel %vm942, %v880, 0
  %v959 = vsel %vm942, %v885, 0
  %v962 = vsel %vm942, %v890, 0
  %v965 = vsel %vm942, %v895, 0
  %v968 = vsel %vm942, %v900, 0
  %v971 = vsel %vm942, %v905, 0
  %v974 = vsel %vm942, %v910, 0
  %v977 = vsel %vm942, %v915, 0
  %v980 = vsel %vm942, %v920, 0
  %v983 = vsel %vm942, %v925, 0
  %v986 = vsel %vm942, %v930, 0
  %v989 = vsel %vm942, %v935, 0
  %991 = vmatprep.subr.mxu0 0.0
  %992 = vmatpush1.msra.mxu0 %v225
  %993 = vmatprep.subr.mxu0 0.0
  %994 = vmatpush1.msra.mxu0 %v226
  %995 = vmatprep.subr.mxu0 0.0
  %996 = vmatpush1.msra.mxu0 %v227
  %997 = vmatprep.subr.mxu0 0.0
  %998 = vmatpush1.msra.mxu0 %v228
  %999 = vmatprep.subr.mxu0 0.0
  %1000 = vmatpush1.msra.mxu0 0.0
  %1001 = vmatprep.subr.mxu0 0.0
  %1002 = vmatpush1.msra.mxu0 0.0
  %1003 = vmatprep.subr.mxu0 0.0
  %1004 = vmatpush1.msra.mxu0 0.0
  %1005 = vmatprep.subr.mxu0 0.0
  %1006 = vmatpush1.msra.mxu0 0.0
  %1007 = vmatprep.subr.mxu0 0.0
  %1008 = vmatpush1.msra.mxu0 0.0
  %1009 = vmatprep.subr.mxu0 0.0
  %1010 = vmatpush1.msra.mxu0 0.0
  %1011 = vmatprep.subr.mxu0 0.0
  %1012 = vmatpush1.msra.mxu0 0.0
  %1013 = vmatprep.subr.mxu0 0.0
  %1014 = vmatpush1.msra.mxu0 0.0
  %1015 = vmatprep.subr.mxu0 0.0
  %1016 = vmatpush1.msra.mxu0 0.0
  %1017 = vmatprep.subr.mxu0 0.0
  %1018 = vmatpush1.msra.mxu0 0.0
  %1019 = vmatprep.subr.mxu0 0.0
  %1020 = vmatpush1.msra.mxu0 0.0
  %1021 = vmatprep.subr.mxu0 0.0
  %1022 = vmatpush1.msra.mxu0 0.0
  %1023 = vmatprep.subr.mxu0 0.0
  %1024 = vmatpush1.msra.mxu0 0.0
  %1025 = vmatprep.subr.mxu0 0.0
  %1026 = vmatpush1.msra.mxu0 0.0
  %1027 = vmatprep.subr.mxu0 0.0
  %1028 = vmatpush1.msra.mxu0 0.0
  %1029 = vmatprep.subr.mxu0 0.0
  %1030 = vmatpush1.msra.mxu0 0.0
  %1031 = vmatprep.subr.mxu0 0.0
  %1032 = vmatpush1.msra.mxu0 0.0
  %1033 = vmatprep.subr.mxu0 0.0
  %1034 = vmatpush1.msra.mxu0 0.0
  %1035 = vmatprep.subr.mxu0 0.0
  %1036 = vmatpush1.msra.mxu0 0.0
  %1037 = vmatprep.subr.mxu0 0.0
  %1038 = vmatpush1.msra.mxu0 0.0
  %1039 = vmatprep.subr.mxu0 0.0
  %1040 = vmatpush1.msra.mxu0 0.0
  %1041 = vmatprep.subr.mxu0 0.0
  %1042 = vmatpush1.msra.mxu0 0.0
  %1043 = vmatprep.subr.mxu0 0.0
  %1044 = vmatpush1.msra.mxu0 0.0
  %1045 = vmatprep.subr.mxu0 0.0
  %1046 = vmatpush1.msra.mxu0 0.0
  %1047 = vmatprep.subr.mxu0 0.0
  %1048 = vmatpush1.msra.mxu0 0.0
  %1049 = vmatprep.subr.mxu0 0.0
  %1050 = vmatpush1.msra.mxu0 0.0
  %1051 = vmatprep.subr.mxu0 0.0
  %1052 = vmatpush1.msra.mxu0 0.0
  %1053 = vmatprep.subr.mxu0 0.0
  %1054 = vmatpush1.msra.mxu0 0.0
  %1055 = vmatprep.mubr.f32.mxu0 0.0
  %1056 = vmatmul.mubr.f32.gmra.mrb[0].mxu0 %v944
  %v1057 = vpop.f32.mrb[0].mxu0
  %v1058 = vadd.f32 %v941, %v1057
  %v1059 = vpop.f32.mrb[0].mxu0
  %1060 = vmatprep.mubr.f32.mxu0 0.0
  %1061 = vmatmul.mubr.f32.gmra.mrb[0].mxu0 %v947
  %v1062 = vpop.f32.mrb[0].mxu0
  %v1063 = vadd.f32 %v941, %v1062
  %v1064 = vpop.f32.mrb[0].mxu0
  %1065 = vmatprep.mubr.f32.mxu0 0.0
  %1066 = vmatmul.mubr.f32.gmra.mrb[0].mxu0 %v950
  %v1067 = vpop.f32.mrb[0].mxu0
  %v1068 = vadd.f32 %v941, %v1067
  %v1069 = vpop.f32.mrb[0].mxu0
  %1070 = vmatprep.mubr.f32.mxu0 0.0
  %1071 = vmatmul.mubr.f32.gmra.mrb[0].mxu0 %v953
  %v1072 = vpop.f32.mrb[0].mxu0
  %v1073 = vadd.f32 %v941, %v1072
  %v1074 = vpop.f32.mrb[0].mxu0
  %1075 = vmatprep.mubr.f32.mxu0 0.0
  %1076 = vmatmul.mubr.f32.gmra.mrb[0].mxu0 %v956
  %v1077 = vpop.f32.mrb[0].mxu0
  %v1078 = vadd.f32 %v941, %v1077
  %v1079 = vpop.f32.mrb[0].mxu0
  %1080 = vmatprep.mubr.f32.mxu0 0.0
  %1081 = vmatmul.mubr.f32.gmra.mrb[0].mxu0 %v959
  %v1082 = vpop.f32.mrb[0].mxu0
  %v1083 = vadd.f32 %v941, %v1082
  %v1084 = vpop.f32.mrb[0].mxu0
  %1085 = vmatprep.mubr.f32.mxu0 0.0
  %1086 = vmatmul.mubr.f32.gmra.mrb[0].mxu0 %v962
  %v1087 = vpop.f32.mrb[0].mxu0
  %v1088 = vadd.f32 %v941, %v1087
  %v1089 = vpop.f32.mrb[0].mxu0
  %1090 = vmatprep.mubr.f32.mxu0 0.0
  %1091 = vmatmul.mubr.f32.gmra.mrb[0].mxu0 %v965
  %v1092 = vpop.f32.mrb[0].mxu0
  %v1093 = vadd.f32 %v941, %v1092
  %v1094 = vpop.f32.mrb[0].mxu0
  %1095 = vmatprep.mubr.f32.mxu0 0.0
  %1096 = vmatmul.mubr.f32.gmra.mrb[0].mxu0 %v968
  %v1097 = vpop.f32.mrb[0].mxu0
  %v1098 = vadd.f32 %v941, %v1097
  %v1099 = vpop.f32.mrb[0].mxu0
  %1100 = vmatprep.mubr.f32.mxu0 0.0
  %1101 = vmatmul.mubr.f32.gmra.mrb[0].mxu0 %v971
  %v1102 = vpop.f32.mrb[0].mxu0
  %v1103 = vadd.f32 %v941, %v1102
  %v1104 = vpop.f32.mrb[0].mxu0
  %1105 = vmatprep.mubr.f32.mxu0 0.0
  %1106 = vmatmul.mubr.f32.gmra.mrb[0].mxu0 %v974
  %v1107 = vpop.f32.mrb[0].mxu0
  %v1108 = vadd.f32 %v941, %v1107
  %v1109 = vpop.f32.mrb[0].mxu0
  %1110 = vmatprep.mubr.f32.mxu0 0.0
  %1111 = vmatmul.mubr.f32.gmra.mrb[0].mxu0 %v977
  %v1112 = vpop.f32.mrb[0].mxu0
  %v1113 = vadd.f32 %v941, %v1112
  %v1114 = vpop.f32.mrb[0].mxu0
  %1115 = vmatprep.mubr.f32.mxu0 0.0
  %1116 = vmatmul.mubr.f32.gmra.mrb[0].mxu0 %v980
  %v1117 = vpop.f32.mrb[0].mxu0
  %v1118 = vadd.f32 %v941, %v1117
  %v1119 = vpop.f32.mrb[0].mxu0
  %1120 = vmatprep.mubr.f32.mxu0 0.0
  %1121 = vmatmul.mubr.f32.gmra.mrb[0].mxu0 %v983
  %v1122 = vpop.f32.mrb[0].mxu0
  %v1123 = vadd.f32 %v941, %v1122
  %v1124 = vpop.f32.mrb[0].mxu0
  %1125 = vmatprep.mubr.f32.mxu0 0.0
  %1126 = vmatmul.mubr.f32.gmra.mrb[0].mxu0 %v986
  %v1127 = vpop.f32.mrb[0].mxu0
  %v1128 = vadd.f32 %v941, %v1127
  %v1129 = vpop.f32.mrb[0].mxu0
  %1130 = vmatprep.mubr.f32.mxu0 0.0
  %1131 = vmatmul.mubr.f32.gmra.mrb[0].mxu0 %v989
  %v1132 = vpop.f32.mrb[0].mxu0
  %v1133 = vadd.f32 %v941, %v1132
  %v1134 = vpop.f32.mrb[0].mxu0
  %1135 = vdwg.mxu0
  %1136 = vmatprep.subr.mxu0 0.0
  %1137 = vmatpush1.msra.mxu0 %v621
  %1138 = vmatprep.subr.mxu0 0.0
  %1139 = vmatpush1.msra.mxu0 %v622
  %1140 = vmatprep.subr.mxu0 0.0
  %1141 = vmatpush1.msra.mxu0 %v623
  %1142 = vmatprep.subr.mxu0 0.0
  %1143 = vmatpush1.msra.mxu0 %v624
  %1144 = vmatprep.subr.mxu0 0.0
  %1145 = vmatpush1.msra.mxu0 %v625
  %1146 = vmatprep.subr.mxu0 0.0
  %1147 = vmatpush1.msra.mxu0 %v626
  %1148 = vmatprep.subr.mxu0 0.0
  %1149 = vmatpush1.msra.mxu0 %v627
  %1150 = vmatprep.subr.mxu0 0.0
  %1151 = vmatpush1.msra.mxu0 %v628
  %1152 = vmatprep.subr.mxu0 0.0
  %1153 = vmatpush1.msra.mxu0 %v629
  %1154 = vmatprep.subr.mxu0 0.0
  %1155 = vmatpush1.msra.mxu0 %v630
  %1156 = vmatprep.subr.mxu0 0.0
  %1157 = vmatpush1.msra.mxu0 %v631
  %1158 = vmatprep.subr.mxu0 0.0
  %1159 = vmatpush1.msra.mxu0 %v632
  %1160 = vmatprep.subr.mxu0 0.0
  %1161 = vmatpush1.msra.mxu0 %v633
  %1162 = vmatprep.subr.mxu0 0.0
  %1163 = vmatpush1.msra.mxu0 %v634
  %1164 = vmatprep.subr.mxu0 0.0
  %1165 = vmatpush1.msra.mxu0 %v635
  %1166 = vmatprep.subr.mxu0 0.0
  %1167 = vmatpush1.msra.mxu0 %v636
  %1168 = vmatprep.subr.mxu0 0.0
  %1169 = vmatpush1.msra.mxu0 0.0
  %1170 = vmatprep.subr.mxu0 0.0
  %1171 = vmatpush1.msra.mxu0 0.0
  %1172 = vmatprep.subr.mxu0 0.0
  %1173 = vmatpush1.msra.mxu0 0.0
  %1174 = vmatprep.subr.mxu0 0.0
  %1175 = vmatpush1.msra.mxu0 0.0
  %1176 = vmatprep.subr.mxu0 0.0
  %1177 = vmatpush1.msra.mxu0 0.0
  %1178 = vmatprep.subr.mxu0 0.0
  %1179 = vmatpush1.msra.mxu0 0.0
  %1180 = vmatprep.subr.mxu0 0.0
  %1181 = vmatpush1.msra.mxu0 0.0
  %1182 = vmatprep.subr.mxu0 0.0
  %1183 = vmatpush1.msra.mxu0 0.0
  %1184 = vmatprep.subr.mxu0 0.0
  %1185 = vmatpush1.msra.mxu0 0.0
  %1186 = vmatprep.subr.mxu0 0.0
  %1187 = vmatpush1.msra.mxu0 0.0
  %1188 = vmatprep.subr.mxu0 0.0
  %1189 = vmatpush1.msra.mxu0 0.0
  %1190 = vmatprep.subr.mxu0 0.0
  %1191 = vmatpush1.msra.mxu0 0.0
  %1192 = vmatprep.subr.mxu0 0.0
  %1193 = vmatpush1.msra.mxu0 0.0
  %1194 = vmatprep.subr.mxu0 0.0
  %1195 = vmatpush1.msra.mxu0 0.0
  %1196 = vmatprep.subr.mxu0 0.0
  %1197 = vmatpush1.msra.mxu0 0.0
  %1198 = vmatprep.subr.mxu0 0.0
  %1199 = vmatpush1.msra.mxu0 0.0
  %1200 = vmatprep.mubr.f32.mxu0 0.0
  %1201 = vmatmul.mubr.f32.gmra.mrb[0].mxu0 %v190
  %v1202 = vpop.f32.mrb[0].mxu0
  %v1203 = vadd.f32 0.0, %v1202
  %v1204 = vpop.f32.mrb[0].mxu0
  %1205 = vdwg.mxu0
  %v1206 = vlaneseq
  %v1207 = vshrl.u32 %v1206, 7
  %v1208 = vsub.s32 3, %v1207
  %v1209 = vrot.slane %v229, %v1208
  %1214 = vrot.lane.b32.xlu0 %v225, 96
  %v1215 = vpop.permute.xlu0 %1214
  %1216 = vrot.lane.b32.xlu0 %v226, 96
  %v1217 = vpop.permute.xlu0 %1216
  %1218 = vrot.lane.b32.xlu0 %v227, 96
  %v1219 = vpop.permute.xlu0 %1218
  %1220 = vrot.lane.b32.xlu0 %v228, 96
  %v1221 = vpop.permute.xlu0 %1220
  %v1227 = vsel %vm942, %v1203, 0
  %1229 = vmatprep.subr.mxu0 0.0
  %1230 = vmatpush1.msra.mxu0 %v1215
  %1231 = vmatprep.subr.mxu0 0.0
  %1232 = vmatpush1.msra.mxu0 %v1217
  %1233 = vmatprep.subr.mxu0 0.0
  %1234 = vmatpush1.msra.mxu0 %v1219
  %1235 = vmatprep.subr.mxu0 0.0
  %1236 = vmatpush1.msra.mxu0 %v1221
  %1237 = vmatprep.subr.mxu0 0.0
  %1238 = vmatpush1.msra.mxu0 0.0
  %1239 = vmatprep.subr.mxu0 0.0
  %1240 = vmatpush1.msra.mxu0 0.0
  %1241 = vmatprep.subr.mxu0 0.0
  %1242 = vmatpush1.msra.mxu0 0.0
  %1243 = vmatprep.subr.mxu0 0.0
  %1244 = vmatpush1.msra.mxu0 0.0
  %1245 = vmatprep.subr.mxu0 0.0
  %1246 = vmatpush1.msra.mxu0 0.0
  %1247 = vmatprep.subr.mxu0 0.0
  %1248 = vmatpush1.msra.mxu0 0.0
  %1249 = vmatprep.subr.mxu0 0.0
  %1250 = vmatpush1.msra.mxu0 0.0
  %1251 = vmatprep.subr.mxu0 0.0
  %1252 = vmatpush1.msra.mxu0 0.0
  %1253 = vmatprep.subr.mxu0 0.0
  %1254 = vmatpush1.msra.mxu0 0.0
  %1255 = vmatprep.subr.mxu0 0.0
  %1256 = vmatpush1.msra.mxu0 0.0
  %1257 = vmatprep.subr.mxu0 0.0
  %1258 = vmatpush1.msra.mxu0 0.0
  %1259 = vmatprep.subr.mxu0 0.0
  %1260 = vmatpush1.msra.mxu0 0.0
  %1261 = vmatprep.subr.mxu0 0.0
  %1262 = vmatpush1.msra.mxu0 0.0
  %1263 = vmatprep.subr.mxu0 0.0
  %1264 = vmatpush1.msra.mxu0 0.0
  %1265 = vmatprep.subr.mxu0 0.0
  %1266 = vmatpush1.msra.mxu0 0.0
  %1267 = vmatprep.subr.mxu0 0.0
  %1268 = vmatpush1.msra.mxu0 0.0
  %1269 = vmatprep.subr.mxu0 0.0
  %1270 = vmatpush1.msra.mxu0 0.0
  %1271 = vmatprep.subr.mxu0 0.0
  %1272 = vmatpush1.msra.mxu0 0.0
  %1273 = vmatprep.subr.mxu0 0.0
  %1274 = vmatpush1.msra.mxu0 0.0
  %1275 = vmatprep.subr.mxu0 0.0
  %1276 = vmatpush1.msra.mxu0 0.0
  %1277 = vmatprep.subr.mxu0 0.0
  %1278 = vmatpush1.msra.mxu0 0.0
  %1279 = vmatprep.subr.mxu0 0.0
  %1280 = vmatpush1.msra.mxu0 0.0
  %1281 = vmatprep.subr.mxu0 0.0
  %1282 = vmatpush1.msra.mxu0 0.0
  %1283 = vmatprep.subr.mxu0 0.0
  %1284 = vmatpush1.msra.mxu0 0.0
  %1285 = vmatprep.subr.mxu0 0.0
  %1286 = vmatpush1.msra.mxu0 0.0
  %1287 = vmatprep.subr.mxu0 0.0
  %1288 = vmatpush1.msra.mxu0 0.0
  %1289 = vmatprep.subr.mxu0 0.0
  %1290 = vmatpush1.msra.mxu0 0.0
  %1291 = vmatprep.subr.mxu0 0.0
  %1292 = vmatpush1.msra.mxu0 0.0
  %1293 = vmatprep.mubr.f32.mxu0 0.0
  %1294 = vmatmul.mubr.f32.gmra.mrb[0].mxu0 %v1227
  %v1295 = vpop.f32.mrb[0].mxu0
  %v1296 = vadd.f32 %v1209, %v1295
  %v1297 = vpop.f32.mrb[0].mxu0
  %1298 = vdwg.mxu0
  %1299 = vst.msk [vmem:[%s5] sm:$0xff] %vm942, %v1296
  %1300 = vst.msk [vmem:[%s5 + $0x8] sm:$0xff] %vm942, %v1058
  %1301 = vst.msk [vmem:[%s5 + $0x10] sm:$0xff] %vm942, %v1063
  %1302 = vst.msk [vmem:[%s5 + $0x18] sm:$0xff] %vm942, %v1068
  %1303 = vst.msk [vmem:[%s5 + $0x20] sm:$0xff] %vm942, %v1073
  %1304 = vst.msk [vmem:[%s5 + $0x28] sm:$0xff] %vm942, %v1078
  %1305 = vst.msk [vmem:[%s5 + $0x30] sm:$0xff] %vm942, %v1083
  %1306 = vst.msk [vmem:[%s5 + $0x38] sm:$0xff] %vm942, %v1088
  %1307 = vst.msk [vmem:[%s5 + $0x40] sm:$0xff] %vm942, %v1093
  %1308 = vst.msk [vmem:[%s5 + $0x48] sm:$0xff] %vm942, %v1098
  %1309 = vst.msk [vmem:[%s5 + $0x50] sm:$0xff] %vm942, %v1103
  %1310 = vst.msk [vmem:[%s5 + $0x58] sm:$0xff] %vm942, %v1108
  %1311 = vst.msk [vmem:[%s5 + $0x60] sm:$0xff] %vm942, %v1113
  %1312 = vst.msk [vmem:[%s5 + $0x68] sm:$0xff] %vm942, %v1118
  %1313 = vst.msk [vmem:[%s5 + $0x70] sm:$0xff] %vm942, %v1123
  %1314 = vst.msk [vmem:[%s5 + $0x78] sm:$0xff] %vm942, %v1128
  %1315 = vst.msk [vmem:[%s5 + $0x80] sm:$0xff] %vm942, %v1133
  %v1317 = vsel %vm942, %v1296, 0
  %v1320 = vsel %vm942, %v1058, 0
  %v1323 = vsel %vm942, %v1063, 0
  %v1326 = vsel %vm942, %v1068, 0
  %v1329 = vsel %vm942, %v1073, 0
  %v1332 = vsel %vm942, %v1078, 0
  %v1335 = vsel %vm942, %v1083, 0
  %v1338 = vsel %vm942, %v1088, 0
  %v1341 = vsel %vm942, %v1093, 0
  %v1344 = vsel %vm942, %v1098, 0
  %v1347 = vsel %vm942, %v1103, 0
  %v1350 = vsel %vm942, %v1108, 0
  %v1353 = vsel %vm942, %v1113, 0
  %v1356 = vsel %vm942, %v1118, 0
  %v1359 = vsel %vm942, %v1123, 0
  %v1362 = vsel %vm942, %v1128, 0
  %v1365 = vsel %vm942, %v1133, 0
  %1367 = vmatprep.subr.mxu0 0.0
  %1368 = vmatpush1.xpose.msra.mxu0 %v1320
  %1369 = vmatprep.subr.mxu0 0.0
  %1370 = vmatpush1.xpose.msra.mxu0 %v1323
  %1371 = vmatprep.subr.mxu0 0.0
  %1372 = vmatpush1.xpose.msra.mxu0 %v1326
  %1373 = vmatprep.subr.mxu0 0.0
  %1374 = vmatpush1.xpose.msra.mxu0 %v1329
  %1375 = vmatprep.subr.mxu0 0.0
  %1376 = vmatpush1.xpose.msra.mxu0 %v1332
  %1377 = vmatprep.subr.mxu0 0.0
  %1378 = vmatpush1.xpose.msra.mxu0 %v1335
  %1379 = vmatprep.subr.mxu0 0.0
  %1380 = vmatpush1.xpose.msra.mxu0 %v1338
  %1381 = vmatprep.subr.mxu0 0.0
  %1382 = vmatpush1.xpose.msra.mxu0 %v1341
  %1383 = vmatprep.subr.mxu0 0.0
  %1384 = vmatpush1.xpose.msra.mxu0 %v1344
  %1385 = vmatprep.subr.mxu0 0.0
  %1386 = vmatpush1.xpose.msra.mxu0 %v1347
  %1387 = vmatprep.subr.mxu0 0.0
  %1388 = vmatpush1.xpose.msra.mxu0 %v1350
  %1389 = vmatprep.subr.mxu0 0.0
  %1390 = vmatpush1.xpose.msra.mxu0 %v1353
  %1391 = vmatprep.subr.mxu0 0.0
  %1392 = vmatpush1.xpose.msra.mxu0 %v1356
  %1393 = vmatprep.subr.mxu0 0.0
  %1394 = vmatpush1.xpose.msra.mxu0 %v1359
  %1395 = vmatprep.subr.mxu0 0.0
  %1396 = vmatpush1.xpose.msra.mxu0 %v1362
  %1397 = vmatprep.subr.mxu0 0.0
  %1398 = vmatpush1.xpose.msra.mxu0 %v1365
  %1399 = vmatprep.subr.mxu0 0.0
  %1400 = vmatpush1.xpose.msra.mxu0 0.0
  %1401 = vmatprep.subr.mxu0 0.0
  %1402 = vmatpush1.xpose.msra.mxu0 0.0
  %1403 = vmatprep.subr.mxu0 0.0
  %1404 = vmatpush1.xpose.msra.mxu0 0.0
  %1405 = vmatprep.subr.mxu0 0.0
  %1406 = vmatpush1.xpose.msra.mxu0 0.0
  %1407 = vmatprep.subr.mxu0 0.0
  %1408 = vmatpush1.xpose.msra.mxu0 0.0
  %1409 = vmatprep.subr.mxu0 0.0
  %1410 = vmatpush1.xpose.msra.mxu0 0.0
  %1411 = vmatprep.subr.mxu0 0.0
  %1412 = vmatpush1.xpose.msra.mxu0 0.0
  %1413 = vmatprep.subr.mxu0 0.0
  %1414 = vmatpush1.xpose.msra.mxu0 0.0
  %1415 = vmatprep.subr.mxu0 0.0
  %1416 = vmatpush1.xpose.msra.mxu0 0.0
  %1417 = vmatprep.subr.mxu0 0.0
  %1418 = vmatpush1.xpose.msra.mxu0 0.0
  %1419 = vmatprep.subr.mxu0 0.0
  %1420 = vmatpush1.xpose.msra.mxu0 0.0
  %1421 = vmatprep.subr.mxu0 0.0
  %1422 = vmatpush1.xpose.msra.mxu0 0.0
  %1423 = vmatprep.subr.mxu0 0.0
  %1424 = vmatpush1.xpose.msra.mxu0 0.0
  %1425 = vmatprep.subr.mxu0 0.0
  %1426 = vmatpush1.xpose.msra.mxu0 0.0
  %1427 = vmatprep.subr.mxu0 0.0
  %1428 = vmatpush1.xpose.msra.mxu0 0.0
  %1429 = vmatprep.subr.mxu0 0.0
  %1430 = vmatpush1.xpose.msra.mxu0 0.0
  %1431 = vmatprep.mubr.f32.mxu0 0.0
  %1432 = vmatmul.mubr.f32.gmra.mrb[0].mxu0 %v1317
  %v1433 = vpop.f32.mrb[0].mxu0
  %v1434 = vadd.f32 0.0, %v1433
  %v1435 = vpop.f32.mrb[0].mxu0
  %1436 = vdwg.mxu0
  %1437 = vst [vmem:[%s6] sm:$0xff] %v1434
  // Predicated region
  $region22: #{model_forward.1} parent=0 // pred_check
    _
  $region23: #{model_forward.1} parent=0 // pred_check_branch
    %1439 = sbr.rel (0) target = $region25
  $region24: #{model_forward.1} parent=0 // pred_region
    _
  $region25: #{model_forward.1} parent=0 // pred_fallthru
    _
  // Predicated region
  $region26: #{model_forward.1} parent=0 // pred_check
    _
  $region27: #{model_forward.1} parent=0 // pred_check_branch
    %1441 = sbr.rel (0) target = $region29
  $region28: #{model_forward.1} parent=0 // pred_region
    _
  $region29: #{model_forward.1} parent=0 // pred_fallthru
    _
  // Predicated region
  $region30: #{model_forward.1} parent=0 // pred_check
    _
  $region31: #{model_forward.1} parent=0 // pred_check_branch
    %1443 = sbr.rel (0) target = $region33
  $region32: #{model_forward.1} parent=0 // pred_region
    _
  $region33: #{model_forward.1} parent=0 // pred_fallthru
    _
  // Predicated region
  $region34: #{model_forward.1} parent=0 // pred_check
    _
  $region35: #{model_forward.1} parent=0 // pred_check_branch
    %1445 = sbr.rel (0) target = $region37
  $region36: #{model_forward.1} parent=0 // pred_region
    _
  $region37: #{model_forward.1} parent=0 // pred_fallthru
    _

</llo_original>
